<compile_context>
chip_gen: v5e
topology: v5e:2x2
jax: 0.10.0
libtpu: 0.0.40
codegen_flags: <defaults>
</compile_context>

<pallas_src>
import functools

import jax
import jax.numpy as jnp
from jax import lax
from jax.experimental import pallas as pl
from jax.experimental.pallas import tpu as pltpu


def _cross_attention_kernel(q_ref, k_ref, v_ref,
                            wk_ref, bk_ref, wv_ref, bv_ref, wo_ref, bo_ref,
                            o_ref,
                            kproj_ref, vproj_ref,
                            *, mm_dtype):
    """One grid step: Bt batch elements x one Lq tile.

    Grid = (B // Bt, Lq // Lq_t).  The Lq axis is innermost ("arbitrary") so
    the K/V projections run once per batch tile (program_id(1) == 0) and stay
    resident in VMEM scratch (stored in mm_dtype) for all Lq tiles of that
    batch tile.  The 1/sqrt(D)*log2(e) scale is pre-folded into wk/bk by the
    wrapper, so the in-kernel softmax uses exp2 directly.
    """
    bt, lq_t, d = q_ref.shape
    lk = k_ref.shape[1]
    f32 = jnp.float32
    nt2d = (((1,), (0,)), ((), ()))          # (M, K) x (K, N)
    qk_b = (((2,), (2,)), ((0,), (0,)))      # batched, contract on shared D
    pv_b = (((2,), (1,)), ((0,), (0,)))      # batched, contract on Lk

    def mm(a, b, dims):
        # MXU matmul; operands in (or cheaply cast to) mm_dtype, f32 accumulate.
        return lax.dot_general(a.astype(mm_dtype), b.astype(mm_dtype), dims,
                               preferred_element_type=f32)

    # ---- K/V projections: once per batch tile, stored in mm_dtype scratch. --
    @pl.when(pl.program_id(1) == 0)
    def _():
        k2d = k_ref[...].reshape(bt * lk, d)
        v2d = v_ref[...].reshape(bt * lk, d)
        kp = mm(k2d, wk_ref[...], nt2d) + bk_ref[...]   # scale already folded in
        vp = mm(v2d, wv_ref[...], nt2d) + bv_ref[...]
        kproj_ref[...] = kp.reshape(bt, lk, d).astype(kproj_ref.dtype)
        vproj_ref[...] = vp.reshape(bt, lk, d).astype(vproj_ref.dtype)

    # ---- Attention for this (batch tile, Lq tile). ---------------------------
    kp = kproj_ref[...]                                  # (Bt, Lk, D) mm_dtype
    vp = vproj_ref[...]                                  # (Bt, Lk, D) mm_dtype

    # Q @ K'^T : batched "NT" contraction on D -- no K transpose materialized.
    # K' already carries 1/sqrt(D)*log2(e), so scores live in the exp2 domain.
    scores = mm(q_ref[...], kp, qk_b)                    # (Bt, Lq_t, Lk) f32

    # Numerically-stable softmax numerator via exp2 (EUP slot); normalization
    # is applied after the PV matmul on only Bt*Lq_t*D elements (exact recip).
    m = jnp.max(scores, axis=-1, keepdims=True)
    e = jnp.exp2(scores - m)                             # f32
    denom = jnp.sum(e, axis=-1, keepdims=True)           # (Bt, Lq_t, 1)

    # e @ V : (Bt, Lq_t, Lk) x (Bt, Lk, D) -> (Bt, Lq_t, D), then normalize.
    pv = mm(e, vp, pv_b)
    attn_out = pv * pl.reciprocal(denom)                 # exact, broadcast over D

    # Output projection as one (Bt*Lq_t, D) x (D, D) matmul.
    out = mm(attn_out.reshape(bt * lq_t, d), wo_ref[...], nt2d) + bo_ref[...]
    o_ref[...] = out.reshape(bt, lq_t, d).astype(o_ref.dtype)


def _pick_block_lq(Lq):
    """Largest 8-aligned divisor of Lq that is <= 256 (fills MXU sublanes)."""
    if Lq <= 256:
        return Lq
    for cand in range(256, 7, -8):
        if Lq % cand == 0:
            return cand
    return Lq


def _pick_block_b(B, block_lq, Lk, D, in_bytes, mm_bytes, vmem_budget):
    """Largest block_b whose rough VMEM estimate fits the budget while keeping
    the parallel batch grid axis >= 2 steps (megacore) whenever B >= 2."""
    def vmem_est(bt):
        q_out = 2 * 2 * bt * block_lq * D * in_bytes        # q + out, 2x buffered
        kv_in = 2 * 2 * bt * Lk * D * in_bytes              # k + v inputs, 2x buffered
        kv_scratch = 2 * bt * Lk * D * mm_bytes             # kproj + vproj scratch
        weights = 2 * (3 * D * D * mm_bytes + 4 * D * 4)    # weights/biases, 2x buffered
        return q_out + kv_in + kv_scratch + weights

    cands = [bt for bt in range(min(B, 8), 0, -1) if B % bt == 0]
    fitting = [bt for bt in cands if vmem_est(bt) <= vmem_budget] or [1]
    for bt in fitting:
        if B // bt >= 2 or B == 1:
            return bt
    return fitting[-1]


def cross_attention(query, key, value, params, *, block_b=None, block_lq=None):
    """query: (B, Lq, D); key/value: (B, Lk, D).

    params: wk/wv/wo of shape (D, D) (pre-transposed: y = x @ W + b) and
    bk/bv/bo of shape (1, D).
    """
    B, Lq, D = query.shape
    _, Lk, _ = key.shape

    # bf16 MXU operands when inputs are bf16 (f32 accumulation + f32 softmax).
    mm_dtype = jnp.bfloat16 if query.dtype == jnp.bfloat16 else jnp.float32
    in_bytes = jnp.dtype(query.dtype).itemsize
    mm_bytes = jnp.dtype(mm_dtype).itemsize

    # Generation-aware VMEM budget: 75% of physical VMEM (~96 MiB on v5e/v6e,
    # ~48 MiB on v7x) leaves headroom for compiler internal scratch / spill.
    try:
        vmem_cap = pltpu.get_tpu_info().vmem_capacity_bytes
    except Exception:  # non-TPU backend / older jax: conservative fallback
        vmem_cap = 64 * 1024 * 1024
    vmem_limit = int(vmem_cap * 0.75)

    if block_lq is None:
        block_lq = _pick_block_lq(Lq)
    if block_b is None:
        block_b = _pick_block_b(B, block_lq, Lk, D, in_bytes, mm_bytes, vmem_limit)

    assert B % block_b == 0, "block_b must divide B"
    assert Lq % block_lq == 0, "block_lq must divide Lq"
    if block_b > 1:
        # In-kernel reshapes (Bt, L, D) -> (Bt*L, D) merge a sublane axis; keep
        # it 8-aligned so Mosaic doesn't need a relayout.
        assert block_lq % 8 == 0 and Lk % 8 == 0, \
            "block_lq and Lk must be multiples of 8 when block_b > 1"

    # Fold 1/sqrt(D) * log2(e) into the K projection once (exp2 softmax in the
    # kernel), and pre-cast matmul weights to mm_dtype (no per-step casts,
    # half the weight DMA bytes in bf16).  Biases stay f32 (added post-matmul).
    kscale = jnp.float32(1.4426950408889634 / (D ** 0.5))  # log2(e)/sqrt(D)
    wk = (params["wk"].astype(jnp.float32) * kscale).astype(mm_dtype)
    bk = params["bk"].astype(jnp.float32) * kscale
    wv = params["wv"].astype(mm_dtype)
    bv = params["bv"].astype(jnp.float32)
    wo = params["wo"].astype(mm_dtype)
    bo = params["bo"].astype(jnp.float32)

    kernel = functools.partial(_cross_attention_kernel, mm_dtype=mm_dtype)

    grid = (B // block_b, Lq // block_lq)

    q_spec = pl.BlockSpec((block_b, block_lq, D), lambda b, l: (b, l, 0))
    kv_spec = pl.BlockSpec((block_b, Lk, D), lambda b, l: (b, 0, 0))
    w_spec = pl.BlockSpec((D, D), lambda b, l: (0, 0))
    b_spec = pl.BlockSpec((1, D), lambda b, l: (0, 0))
    o_spec = pl.BlockSpec((block_b, block_lq, D), lambda b, l: (b, l, 0))

    return pl.pallas_call(
        kernel,
        out_shape=jax.ShapeDtypeStruct((B, Lq, D), query.dtype),
        grid_spec=pltpu.PrefetchScalarGridSpec(
            num_scalar_prefetch=0,
            grid=grid,
            in_specs=[q_spec, kv_spec, kv_spec,
                      w_spec, b_spec, w_spec, b_spec, w_spec, b_spec],
            out_specs=o_spec,
            scratch_shapes=[pltpu.VMEM((block_b, Lk, D), mm_dtype),
                            pltpu.VMEM((block_b, Lk, D), mm_dtype)],
        ),
        compiler_params=pltpu.CompilerParams(
            # Lq axis must be "arbitrary": K/V scratch is carried across it.
            dimension_semantics=("parallel", "arbitrary"),
            vmem_limit_bytes=vmem_limit,
        ),
    )(query, key, value, wk, bk, wv, bv, wo, bo)


def reference_cross_attention(query, key, value, params):
    D = query.shape[-1]
    K = key @ params["wk"] + params["bk"]
    V = value @ params["wv"] + params["bv"]
    scores = jnp.einsum("bqd,bkd->bqk", query, K) / (D ** 0.5)
    attn = jax.nn.softmax(scores, axis=-1)
    out = jnp.einsum("bqk,bkd->bqd", attn, V)
    return out @ params["wo"] + params["bo"]


if __name__ == "__main__":
    # Small demo shapes.  D=128 keeps the feature/lane axis dense.  The demo
    # pins block_b=2, block_lq=8 so both grid axes have >1 step and the
    # carried K/V scratch path is exercised; real shapes should use defaults
    # (block_lq up to 256, VMEM-budgeted block_b).
    B, Lq, Lk, D = 4, 16, 16, 128
    key0 = jax.random.PRNGKey(0)
    ks = jax.random.split(key0, 9)

    query = jax.random.normal(ks[0], (B, Lq, D), dtype=jnp.float32)
    key_in = jax.random.normal(ks[1], (B, Lk, D), dtype=jnp.float32)
    value = jax.random.normal(ks[2], (B, Lk, D), dtype=jnp.float32)

    # PyTorch Linear params (weight stored pre-transposed as (D_in, D_out)).
    bound = 1.0 / (D ** 0.5)
    def init_w(k):
        return jax.random.uniform(k, (D, D), jnp.float32, -bound, bound)
    def init_b(k):
        return jax.random.uniform(k, (1, D), jnp.float32, -bound, bound)

    params = {
        "wk": init_w(ks[3]), "bk": init_b(ks[4]),
        "wv": init_w(ks[5]), "bv": init_b(ks[6]),
        "wo": init_w(ks[7]), "bo": init_b(ks[8]),
    }

    out = cross_attention(query, key_in, value, params, block_b=2, block_lq=8)
    out = jax.block_until_ready(out)

    ref = reference_cross_attention(query, key_in, value, params)
    assert out.shape == (B, Lq, D)
    # Residual differences come only from MXU default-precision f32 matmuls
    # (softmax normalization is now exact).
    assert jnp.allclose(out, ref, atol=2e-3, rtol=2e-3), "mismatch vs reference"

    print("KERNEL_OK")
</pallas_src>

<mosaic_0001>
module attributes {stable_mosaic.version = 11 : i64} {
  func.func @_cross_attention_kernel(%arg0: i32, %arg1: i32, %arg2: memref<2x8x128xf32, #tpu.memory_space<vmem>>, %arg3: memref<2x16x128xf32, #tpu.memory_space<vmem>>, %arg4: memref<2x16x128xf32, #tpu.memory_space<vmem>>, %arg5: memref<128x128xf32, #tpu.memory_space<vmem>>, %arg6: memref<1x128xf32, #tpu.memory_space<vmem>>, %arg7: memref<128x128xf32, #tpu.memory_space<vmem>>, %arg8: memref<1x128xf32, #tpu.memory_space<vmem>>, %arg9: memref<128x128xf32, #tpu.memory_space<vmem>>, %arg10: memref<1x128xf32, #tpu.memory_space<vmem>>, %arg11: memref<2x8x128xf32, #tpu.memory_space<vmem>>, %arg12: memref<2x16x128xf32, #tpu.memory_space<vmem>>, %arg13: memref<2x16x128xf32, #tpu.memory_space<vmem>>) attributes {dimension_semantics = [#tpu.dimension_semantics<parallel>, #tpu.dimension_semantics<arbitrary>], iteration_bounds = array<i64: 2, 2>, scalar_prefetch = 0 : i64, scratch_operands = 2 : i64, tpu.core_type = #tpu.core_type<tc>, window_params = [{transform_indices = @transform_0, window_bounds = array<i64: 2, 8, 128>}, {transform_indices = @transform_1, window_bounds = array<i64: 2, 16, 128>}, {transform_indices = @transform_2, window_bounds = array<i64: 2, 16, 128>}, {pipeline_mode = #tpu.pipeline_mode<synchronous>, transform_indices = @transform_3, window_bounds = array<i64: 128, 128>}, {pipeline_mode = #tpu.pipeline_mode<synchronous>, transform_indices = @transform_4, window_bounds = array<i64: 1, 128>}, {pipeline_mode = #tpu.pipeline_mode<synchronous>, transform_indices = @transform_5, window_bounds = array<i64: 128, 128>}, {pipeline_mode = #tpu.pipeline_mode<synchronous>, transform_indices = @transform_6, window_bounds = array<i64: 1, 128>}, {pipeline_mode = #tpu.pipeline_mode<synchronous>, transform_indices = @transform_7, window_bounds = array<i64: 128, 128>}, {pipeline_mode = #tpu.pipeline_mode<synchronous>, transform_indices = @transform_8, window_bounds = array<i64: 1, 128>}, {transform_indices = @transform_9, window_bounds = array<i64: 2, 8, 128>}]} {
    %c0_i32 = arith.constant 0 : i32
    %0 = arith.cmpi eq, %arg1, %c0_i32 : i32
    %1 = arith.extui %0 : i1 to i32
    %c0_i32_0 = arith.constant 0 : i32
    %2 = arith.cmpi ne, %1, %c0_i32_0 : i32
    scf.if %2 {
      %c0_20 = arith.constant 0 : index
      %c0_21 = arith.constant 0 : index
      %c0_22 = arith.constant 0 : index
      %26 = vector.load %arg3[%c0_20, %c0_21, %c0_22] : memref<2x16x128xf32, #tpu.memory_space<vmem>>, vector<2x16x128xf32>
      %27 = vector.shape_cast %26 : vector<2x16x128xf32> to vector<32x128xf32>
      %c0_23 = arith.constant 0 : index
      %c0_24 = arith.constant 0 : index
      %c0_25 = arith.constant 0 : index
      %28 = vector.load %arg4[%c0_23, %c0_24, %c0_25] : memref<2x16x128xf32, #tpu.memory_space<vmem>>, vector<2x16x128xf32>
      %29 = vector.shape_cast %28 : vector<2x16x128xf32> to vector<32x128xf32>
      %c0_26 = arith.constant 0 : index
      %c0_27 = arith.constant 0 : index
      %30 = vector.load %arg5[%c0_26, %c0_27] : memref<128x128xf32, #tpu.memory_space<vmem>>, vector<128x128xf32>
      %cst_28 = arith.constant dense<0.000000e+00> : vector<32x128xf32>
      %31 = tpu.matmul %27, %30, %cst_28 {dimension_numbers = #tpu.dot_dimension_numbers<[1], [0], [0], [1], [0, 0, 1, 1], [], []>} : vector<32x128xf32>, vector<128x128xf32>, vector<32x128xf32> -> vector<32x128xf32>
      %c0_29 = arith.constant 0 : index
      %c0_30 = arith.constant 0 : index
      %32 = vector.load %arg6[%c0_29, %c0_30] : memref<1x128xf32, #tpu.memory_space<vmem>>, vector<1x128xf32>
      %33 = vector.broadcast %32 : vector<1x128xf32> to vector<32x128xf32>
      %34 = arith.addf %31, %33 : vector<32x128xf32>
      %c0_31 = arith.constant 0 : index
      %c0_32 = arith.constant 0 : index
      %35 = vector.load %arg7[%c0_31, %c0_32] : memref<128x128xf32, #tpu.memory_space<vmem>>, vector<128x128xf32>
      %cst_33 = arith.constant dense<0.000000e+00> : vector<32x128xf32>
      %36 = tpu.matmul %29, %35, %cst_33 {dimension_numbers = #tpu.dot_dimension_numbers<[1], [0], [0], [1], [0, 0, 1, 1], [], []>} : vector<32x128xf32>, vector<128x128xf32>, vector<32x128xf32> -> vector<32x128xf32>
      %c0_34 = arith.constant 0 : index
      %c0_35 = arith.constant 0 : index
      %37 = vector.load %arg8[%c0_34, %c0_35] : memref<1x128xf32, #tpu.memory_space<vmem>>, vector<1x128xf32>
      %38 = vector.broadcast %37 : vector<1x128xf32> to vector<32x128xf32>
      %39 = arith.addf %36, %38 : vector<32x128xf32>
      %40 = vector.shape_cast %34 : vector<32x128xf32> to vector<2x16x128xf32>
      %c0_36 = arith.constant 0 : index
      %c0_37 = arith.constant 0 : index
      %c0_38 = arith.constant 0 : index
      %41 = vector.load %arg12[%c0_36, %c0_37, %c0_38] : memref<2x16x128xf32, #tpu.memory_space<vmem>>, vector<2x16x128xf32>
      tpu.vector_store %arg12[%c0_36, %c0_37, %c0_38], %40 {strides = array<i32>} : memref<2x16x128xf32, #tpu.memory_space<vmem>>, vector<2x16x128xf32>,
      %42 = vector.shape_cast %39 : vector<32x128xf32> to vector<2x16x128xf32>
      %c0_39 = arith.constant 0 : index
      %c0_40 = arith.constant 0 : index
      %c0_41 = arith.constant 0 : index
      %43 = vector.load %arg13[%c0_39, %c0_40, %c0_41] : memref<2x16x128xf32, #tpu.memory_space<vmem>>, vector<2x16x128xf32>
      tpu.vector_store %arg13[%c0_39, %c0_40, %c0_41], %42 {strides = array<i32>} : memref<2x16x128xf32, #tpu.memory_space<vmem>>, vector<2x16x128xf32>,
    } else {
    }
    %c0 = arith.constant 0 : index
    %c0_1 = arith.constant 0 : index
    %c0_2 = arith.constant 0 : index
    %3 = vector.load %arg12[%c0, %c0_1, %c0_2] : memref<2x16x128xf32, #tpu.memory_space<vmem>>, vector<2x16x128xf32>
    %c0_3 = arith.constant 0 : index
    %c0_4 = arith.constant 0 : index
    %c0_5 = arith.constant 0 : index
    %4 = vector.load %arg13[%c0_3, %c0_4, %c0_5] : memref<2x16x128xf32, #tpu.memory_space<vmem>>, vector<2x16x128xf32>
    %c0_6 = arith.constant 0 : index
    %c0_7 = arith.constant 0 : index
    %c0_8 = arith.constant 0 : index
    %5 = vector.load %arg2[%c0_6, %c0_7, %c0_8] : memref<2x8x128xf32, #tpu.memory_space<vmem>>, vector<2x8x128xf32>
    %cst = arith.constant dense<0.000000e+00> : vector<2x8x16xf32>
    %6 = tpu.matmul %5, %3, %cst {dimension_numbers = #tpu.dot_dimension_numbers<[2], [2], [1], [1], [0, 0, 0, 1, 1, 1], [0], [0]>} : vector<2x8x128xf32>, vector<2x16x128xf32>, vector<2x8x16xf32> -> vector<2x8x16xf32>
    %cst_9 = arith.constant dense<0xFF800000> : vector<2x8xf32>
    %7 = vector.multi_reduction <maximumf>, %6, %cst_9 [2] : vector<2x8x16xf32> to vector<2x8xf32>
    %8 = vector.shape_cast %7 : vector<2x8xf32> to vector<2x8x1xf32>
    %9 = vector.broadcast %8 : vector<2x8x1xf32> to vector<2x8x16xf32>
    %10 = arith.subf %6, %9 : vector<2x8x16xf32>
    %11 = math.exp2 %10 : vector<2x8x16xf32>
    %cst_10 = arith.constant dense<0.000000e+00> : vector<2x8xf32>
    %12 = vector.multi_reduction <add>, %11, %cst_10 [2] : vector<2x8x16xf32> to vector<2x8xf32>
    %13 = vector.shape_cast %12 : vector<2x8xf32> to vector<2x8x1xf32>
    %cst_11 = arith.constant dense<0.000000e+00> : vector<2x8x128xf32>
    %14 = tpu.matmul %11, %4, %cst_11 {dimension_numbers = #tpu.dot_dimension_numbers<[2], [1], [1], [2], [0, 0, 0, 1, 1, 2], [0], [0]>} : vector<2x8x16xf32>, vector<2x16x128xf32>, vector<2x8x128xf32> -> vector<2x8x128xf32>
    %15 = tpu.reciprocal %13 : vector<2x8x1xf32> -> vector<2x8x1xf32>
    %16 = vector.broadcast %15 : vector<2x8x1xf32> to vector<2x8x128xf32>
    %17 = arith.mulf %14, %16 : vector<2x8x128xf32>
    %18 = vector.shape_cast %17 : vector<2x8x128xf32> to vector<16x128xf32>
    %c0_12 = arith.constant 0 : index
    %c0_13 = arith.constant 0 : index
    %19 = vector.load %arg9[%c0_12, %c0_13] : memref<128x128xf32, #tpu.memory_space<vmem>>, vector<128x128xf32>
    %cst_14 = arith.constant dense<0.000000e+00> : vector<16x128xf32>
    %20 = tpu.matmul %18, %19, %cst_14 {dimension_numbers = #tpu.dot_dimension_numbers<[1], [0], [0], [1], [0, 0, 1, 1], [], []>} : vector<16x128xf32>, vector<128x128xf32>, vector<16x128xf32> -> vector<16x128xf32>
    %c0_15 = arith.constant 0 : index
    %c0_16 = arith.constant 0 : index
    %21 = vector.load %arg10[%c0_15, %c0_16] : memref<1x128xf32, #tpu.memory_space<vmem>>, vector<1x128xf32>
    %22 = vector.broadcast %21 : vector<1x128xf32> to vector<16x128xf32>
    %23 = arith.addf %20, %22 : vector<16x128xf32>
    %24 = vector.shape_cast %23 : vector<16x128xf32> to vector<2x8x128xf32>
    %c0_17 = arith.constant 0 : index
    %c0_18 = arith.constant 0 : index
    %c0_19 = arith.constant 0 : index
    %25 = vector.load %arg11[%c0_17, %c0_18, %c0_19] : memref<2x8x128xf32, #tpu.memory_space<vmem>>, vector<2x8x128xf32>
    tpu.vector_store %arg11[%c0_17, %c0_18, %c0_19], %24 {strides = array<i32>} : memref<2x8x128xf32, #tpu.memory_space<vmem>>, vector<2x8x128xf32>,
    return
  }
  func.func @transform_0(%arg0: i32, %arg1: i32) -> (i32, i32, i32) {
    %c0_i32 = arith.constant 0 : i32
    %c0_i32_0 = arith.constant 0 : i32
    return %arg0, %arg1, %c0_i32 : i32, i32, i32
  }
  func.func @transform_1(%arg0: i32, %arg1: i32) -> (i32, i32, i32) {
    %c0_i32 = arith.constant 0 : i32
    %c0_i32_0 = arith.constant 0 : i32
    %c0_i32_1 = arith.constant 0 : i32
    return %arg0, %c0_i32, %c0_i32_0 : i32, i32, i32
  }
  func.func @transform_2(%arg0: i32, %arg1: i32) -> (i32, i32, i32) {
    %c0_i32 = arith.constant 0 : i32
    %c0_i32_0 = arith.constant 0 : i32
    %c0_i32_1 = arith.constant 0 : i32
    return %arg0, %c0_i32, %c0_i32_0 : i32, i32, i32
  }
  func.func @transform_3(%arg0: i32, %arg1: i32) -> (i32, i32) {
    %c0_i32 = arith.constant 0 : i32
    %c0_i32_0 = arith.constant 0 : i32
    %c0_i32_1 = arith.constant 0 : i32
    return %c0_i32, %c0_i32_0 : i32, i32
  }
  func.func @transform_4(%arg0: i32, %arg1: i32) -> (i32, i32) {
    %c0_i32 = arith.constant 0 : i32
    %c0_i32_0 = arith.constant 0 : i32
    %c0_i32_1 = arith.constant 0 : i32
    return %c0_i32, %c0_i32_0 : i32, i32
  }
  func.func @transform_5(%arg0: i32, %arg1: i32) -> (i32, i32) {
    %c0_i32 = arith.constant 0 : i32
    %c0_i32_0 = arith.constant 0 : i32
    %c0_i32_1 = arith.constant 0 : i32
    return %c0_i32, %c0_i32_0 : i32, i32
  }
  func.func @transform_6(%arg0: i32, %arg1: i32) -> (i32, i32) {
    %c0_i32 = arith.constant 0 : i32
    %c0_i32_0 = arith.constant 0 : i32
    %c0_i32_1 = arith.constant 0 : i32
    return %c0_i32, %c0_i32_0 : i32, i32
  }
  func.func @transform_7(%arg0: i32, %arg1: i32) -> (i32, i32) {
    %c0_i32 = arith.constant 0 : i32
    %c0_i32_0 = arith.constant 0 : i32
    %c0_i32_1 = arith.constant 0 : i32
    return %c0_i32, %c0_i32_0 : i32, i32
  }
  func.func @transform_8(%arg0: i32, %arg1: i32) -> (i32, i32) {
    %c0_i32 = arith.constant 0 : i32
    %c0_i32_0 = arith.constant 0 : i32
    %c0_i32_1 = arith.constant 0 : i32
    return %c0_i32, %c0_i32_0 : i32, i32
  }
  func.func @transform_9(%arg0: i32, %arg1: i32) -> (i32, i32, i32) {
    %c0_i32 = arith.constant 0 : i32
    %c0_i32_0 = arith.constant 0 : i32
    return %arg0, %arg1, %c0_i32 : i32, i32, i32
  }
}

</mosaic_0001>

<llo_original>
// kernel: tpu_custom_call.1
$region0: #{tpu_custom_call.1}
  #allocation0 [shape = 'u32[]', space=smem, size = 0x4, offset = 0x4, fixed_abs, tag = 'smem constant byte address 0x4 - core index']
  #allocation1 [shape = 'u32[72,128]{1,0:T(1,128)}', space=vmem, size = 0x9000, scoped, tag = 'internal scratch']
  #allocation2 [shape = 'f32[2,16,128]{2,1,0:T(8,128)}', space=vmem, size = 0x4000, scoped, tag = 'scratch operand']
  #allocation3 [shape = 'f32[2,16,128]{2,1,0:T(8,128)}', space=vmem, size = 0x4000, scoped, tag = 'scratch operand']
  %s0 = inlined_call_operand.hbm [shape: f32[4,16,128], index: 0, kind: input, shape index: {}]
  %s1 = inlined_call_operand.hbm [shape: f32[4,16,128], index: 1, kind: input, shape index: {}]
  %s2 = inlined_call_operand.hbm [shape: f32[4,16,128], index: 2, kind: input, shape index: {}]
  %s3 = inlined_call_operand.hbm [shape: f32[128,128], index: 3, kind: input, shape index: {}]
  %s4 = inlined_call_operand.vmem [shape: f32[1,128], index: 4, kind: input, shape index: {}]
  %s5 = inlined_call_operand.hbm [shape: f32[128,128], index: 5, kind: input, shape index: {}]
  %s6 = inlined_call_operand.vmem [shape: f32[1,128], index: 6, kind: input, shape index: {}]
  %s7 = inlined_call_operand.hbm [shape: f32[128,128], index: 7, kind: input, shape index: {}]
  %s8 = inlined_call_operand.vmem [shape: f32[1,128], index: 8, kind: input, shape index: {}]
  %s9 = inlined_call_operand.hbm [shape: f32[4,16,128], index: 9, kind: output, shape index: {}]
  %s10 = sld [smem:[#allocation0]]
  $region97: #{tpu_custom_call.1} parent=0
    _
  %s12 = ssub.s32 1, %s10
  %s13 = scalar_select 0, %s12, %s10
  $region1: #{tpu_custom_call.1} parent=0
    #allocation4 [shape = 'u8[16384]{0}', space=vmem, size = 0x4000, scoped, tag = 'input window, operand 0']
    #allocation5 [shape = 's32[2]{0}', space=sflag, size = 0x8, scoped, tag = 'scoped memory for tpu_custom_call.1']
    #allocation6 [shape = 's32[2]{0}', space=sflag, size = 0x8, scoped, tag = 'scoped memory for tpu_custom_call.1']
    #allocation7 [shape = 'u8[32768]{0}', space=vmem, size = 0x8000, scoped, tag = 'input window, operand 1']
    #allocation8 [shape = 's32[2]{0}', space=sflag, size = 0x8, scoped, tag = 'scoped memory for tpu_custom_call.1']
    #allocation9 [shape = 'u8[32768]{0}', space=vmem, size = 0x8000, scoped, tag = 'input window, operand 2']
    #allocation10 [shape = 'u8[65536]{0}', space=vmem, size = 0x10000, scoped, tag = 'input window, operand 3, single buffered']
    #allocation11 [shape = 's32[1]{0}', space=sflag, size = 0x4, scoped, tag = 'scoped memory for tpu_custom_call.1']
    #allocation12 [shape = 'u8[65536]{0}', space=vmem, size = 0x10000, scoped, tag = 'input window, operand 5, single buffered']
    #allocation13 [shape = 'u8[65536]{0}', space=vmem, size = 0x10000, scoped, tag = 'input window, operand 7, single buffered']
    #allocation14 [shape = 's32[1]{0}', space=sflag, size = 0x4, scoped, tag = 'scoped memory for tpu_custom_call.1']
    #allocation15 [shape = 'u8[16384]{0}', space=vmem, size = 0x4000, scoped, tag = 'output window, operand 0']
    %14 = vsyncpa [#allocation5], 0
    %s15 = scalar_lea.sflag [#allocation5], 1
    %16 = vsyncpa %s15, 0
    %17 = vsyncpa [#allocation8], 0
    %s18 = scalar_lea.sflag [#allocation8], 1
    %19 = vsyncpa %s18, 0
    %20 = vsyncpa [#allocation11], 0
    %21 = vsyncpa [#allocation14], 0
    %22 = vsyncpa [#allocation6], 0
    %s23 = scalar_lea.sflag [#allocation6], 1
    %24 = vsyncpa %s23, 0
    loop: start=0, step=1, limit=6
    $region2: #{tpu_custom_call.1} parent=1 // loop_pre_header
      _
    $region3: #{tpu_custom_call.1} parent=1 // loop_header
      %s26 = sphi 0, %s30
      %p27 = scmp.ge.s32.totalorder %s26, 6
      %s33 = sphi 0, %s45
      %s34 = sphi 0, %s41
      %s35 = sphi 0, %s33
      %s36 = sphi 0, %s34
      %s37 = sphi 0, %s35
      %s38 = sphi 0, %s36
      %s50 = sphi 0, %s52
      %s53 = sphi 0, %s50
      %s54 = sphi 0, %s53
      %s70 = sphi 0, %s54
      %s76 = sphi 0, %s78
      %s79 = sphi 0, %s76
      %s80 = sphi 0, %s79
      %s96 = sphi 0, %s80
      %s102 = sphi 0, %s104
      %s105 = sphi 0, %s102
      %s106 = sphi 0, %s105
      %s122 = sphi 0, %s106
      %s126 = sphi 0, %s126
      %s128 = sphi 0, %s126
      %s129 = sphi 0, %s128
      %s143 = sphi 0, %s129
      %s147 = sphi 0, %s147
      %s149 = sphi 0, %s147
      %s150 = sphi 0, %s149
      %s164 = sphi 0, %s150
      %s168 = sphi 0, %s168
      %s170 = sphi 0, %s168
      %s171 = sphi 0, %s170
      %s185 = sphi 0, %s171
      %s189 = sphi 0, %s189
      %s191 = sphi 0, %s189
      %s192 = sphi 0, %s191
      %s206 = sphi 0, %s192
      %s210 = sphi 0, %s210
      %s212 = sphi 0, %s210
      %s213 = sphi 0, %s212
      %s227 = sphi 0, %s213
      %s231 = sphi 0, %s231
      %s233 = sphi 0, %s231
      %s234 = sphi 0, %s233
      %s248 = sphi 0, %s234
      %s256 = sphi 0, %s258
      %s259 = sphi 0, %s256
      %s260 = sphi 0, %s259
      %s276 = sphi 0, %s260
    $region4: #{tpu_custom_call.1} parent=1 // loop_header_branch
      %29 = sbr.rel (%p27) target = $region8
    $region5: #{tpu_custom_call.1} parent=1 // loop_body
      %s31 = ssub.s32 %s26, 1
      %s32 = ssub.s32 %s26, 2
      %s39 = sadd.s32 1, %s34
      %p40 = scmp.ge.s32.totalorder %s39, 2
      %s41 = scalar_select %p40, 0, %s39
      %s42 = sadd.s32 1, %s33
      %s43 = scalar_select %p40, %s42, %s33
      %p44 = scmp.ge.s32.totalorder %s43, 2
      %s45 = scalar_select %p44, 0, %s43
      %s46 = ssub.s32 %s33, %s45
      %s47 = ssub.s32 %s34, %s41
      %s48 = sor.u32 %s46, %s47
      %p49 = scmp.eq.s32.totalorder %s48, 0
      %s51 = sadd.s32 %s50, 1
      %s52 = scalar_select %p49, %s50, %s51
      %p55 = pneg %p49
      %p56 = scmp.eq.s32.totalorder %s26, 3
      %p57 = por %p55, %p56
      %p58 = scmp.ne.s32.totalorder %s50, %s53
      %p59 = scmp.eq.s32.totalorder %s26, 0
      %p60 = por %p58, %p59
      %p61 = scmp.ne.s32.totalorder %s50, %s53
      %p62 = scmp.eq.s32.totalorder %s31, 3
      %p63 = por %p61, %p62
      %p64 = scmp.ne.s32.totalorder %s53, %s54
      %p65 = scmp.eq.s32.totalorder %s31, 0
      %p66 = por %p64, %p65
      %p67 = scmp.ne.s32.totalorder %s53, %s54
      %p68 = scmp.eq.s32.totalorder %s32, 3
      %p69 = por %p67, %p68
      %p71 = scmp.ne.s32.totalorder %s54, %s70
      %p72 = scmp.eq.s32.totalorder %s32, 0
      %p73 = por %p71, %p72
      %s74 = ssub.s32 %s33, %s45
      %p75 = scmp.eq.s32.totalorder %s74, 0
      %s77 = sadd.s32 %s76, 1
      %s78 = scalar_select %p75, %s76, %s77
      %p81 = pneg %p75
      %p82 = scmp.eq.s32.totalorder %s26, 3
      %p83 = por %p81, %p82
      %p84 = scmp.ne.s32.totalorder %s76, %s79
      %p85 = scmp.eq.s32.totalorder %s26, 0
      %p86 = por %p84, %p85
      %p87 = scmp.ne.s32.totalorder %s76, %s79
      %p88 = scmp.eq.s32.totalorder %s31, 3
      %p89 = por %p87, %p88
      %p90 = scmp.ne.s32.totalorder %s79, %s80
      %p91 = scmp.eq.s32.totalorder %s31, 0
      %p92 = por %p90, %p91
      %p93 = scmp.ne.s32.totalorder %s79, %s80
      %p94 = scmp.eq.s32.totalorder %s32, 3
      %p95 = por %p93, %p94
      %p97 = scmp.ne.s32.totalorder %s80, %s96
      %p98 = scmp.eq.s32.totalorder %s32, 0
      %p99 = por %p97, %p98
      %s100 = ssub.s32 %s33, %s45
      %p101 = scmp.eq.s32.totalorder %s100, 0
      %s103 = sadd.s32 %s102, 1
      %s104 = scalar_select %p101, %s102, %s103
      %p107 = pneg %p101
      %p108 = scmp.eq.s32.totalorder %s26, 3
      %p109 = por %p107, %p108
      %p110 = scmp.ne.s32.totalorder %s102, %s105
      %p111 = scmp.eq.s32.totalorder %s26, 0
      %p112 = por %p110, %p111
      %p113 = scmp.ne.s32.totalorder %s102, %s105
      %p114 = scmp.eq.s32.totalorder %s31, 3
      %p115 = por %p113, %p114
      %p116 = scmp.ne.s32.totalorder %s105, %s106
      %p117 = scmp.eq.s32.totalorder %s31, 0
      %p118 = por %p116, %p117
      %p119 = scmp.ne.s32.totalorder %s105, %s106
      %p120 = scmp.eq.s32.totalorder %s32, 3
      %p121 = por %p119, %p120
      %p123 = scmp.ne.s32.totalorder %s106, %s122
      %p124 = scmp.eq.s32.totalorder %s32, 0
      %p125 = por %p123, %p124
      %s127 = sadd.s32 %s126, 1
      %p130 = scmp.eq.s32.totalorder %s26, 3
      %p131 = scmp.ne.s32.totalorder %s126, %s128
      %p132 = scmp.eq.s32.totalorder %s26, 0
      %p133 = por %p131, %p132
      %p134 = scmp.ne.s32.totalorder %s126, %s128
      %p135 = scmp.eq.s32.totalorder %s31, 3
      %p136 = por %p134, %p135
      %p137 = scmp.ne.s32.totalorder %s128, %s129
      %p138 = scmp.eq.s32.totalorder %s31, 0
      %p139 = por %p137, %p138
      %p140 = scmp.ne.s32.totalorder %s128, %s129
      %p141 = scmp.eq.s32.totalorder %s32, 3
      %p142 = por %p140, %p141
      %p144 = scmp.ne.s32.totalorder %s129, %s143
      %p145 = scmp.eq.s32.totalorder %s32, 0
      %p146 = por %p144, %p145
      %s148 = sadd.s32 %s147, 1
      %p151 = scmp.eq.s32.totalorder %s26, 3
      %p152 = scmp.ne.s32.totalorder %s147, %s149
      %p153 = scmp.eq.s32.totalorder %s26, 0
      %p154 = por %p152, %p153
      %p155 = scmp.ne.s32.totalorder %s147, %s149
      %p156 = scmp.eq.s32.totalorder %s31, 3
      %p157 = por %p155, %p156
      %p158 = scmp.ne.s32.totalorder %s149, %s150
      %p159 = scmp.eq.s32.totalorder %s31, 0
      %p160 = por %p158, %p159
      %p161 = scmp.ne.s32.totalorder %s149, %s150
      %p162 = scmp.eq.s32.totalorder %s32, 3
      %p163 = por %p161, %p162
      %p165 = scmp.ne.s32.totalorder %s150, %s164
      %p166 = scmp.eq.s32.totalorder %s32, 0
      %p167 = por %p165, %p166
      %s169 = sadd.s32 %s168, 1
      %p172 = scmp.eq.s32.totalorder %s26, 3
      %p173 = scmp.ne.s32.totalorder %s168, %s170
      %p174 = scmp.eq.s32.totalorder %s26, 0
      %p175 = por %p173, %p174
      %p176 = scmp.ne.s32.totalorder %s168, %s170
      %p177 = scmp.eq.s32.totalorder %s31, 3
      %p178 = por %p176, %p177
      %p179 = scmp.ne.s32.totalorder %s170, %s171
      %p180 = scmp.eq.s32.totalorder %s31, 0
      %p181 = por %p179, %p180
      %p182 = scmp.ne.s32.totalorder %s170, %s171
      %p183 = scmp.eq.s32.totalorder %s32, 3
      %p184 = por %p182, %p183
      %p186 = scmp.ne.s32.totalorder %s171, %s185
      %p187 = scmp.eq.s32.totalorder %s32, 0
      %p188 = por %p186, %p187
      %s190 = sadd.s32 %s189, 1
      %p193 = scmp.eq.s32.totalorder %s26, 3
      %p194 = scmp.ne.s32.totalorder %s189, %s191
      %p195 = scmp.eq.s32.totalorder %s26, 0
      %p196 = por %p194, %p195
      %p197 = scmp.ne.s32.totalorder %s189, %s191
      %p198 = scmp.eq.s32.totalorder %s31, 3
      %p199 = por %p197, %p198
      %p200 = scmp.ne.s32.totalorder %s191, %s192
      %p201 = scmp.eq.s32.totalorder %s31, 0
      %p202 = por %p200, %p201
      %p203 = scmp.ne.s32.totalorder %s191, %s192
      %p204 = scmp.eq.s32.totalorder %s32, 3
      %p205 = por %p203, %p204
      %p207 = scmp.ne.s32.totalorder %s192, %s206
      %p208 = scmp.eq.s32.totalorder %s32, 0
      %p209 = por %p207, %p208
      %s211 = sadd.s32 %s210, 1
      %p214 = scmp.eq.s32.totalorder %s26, 3
      %p215 = scmp.ne.s32.totalorder %s210, %s212
      %p216 = scmp.eq.s32.totalorder %s26, 0
      %p217 = por %p215, %p216
      %p218 = scmp.ne.s32.totalorder %s210, %s212
      %p219 = scmp.eq.s32.totalorder %s31, 3
      %p220 = por %p218, %p219
      %p221 = scmp.ne.s32.totalorder %s212, %s213
      %p222 = scmp.eq.s32.totalorder %s31, 0
      %p223 = por %p221, %p222
      %p224 = scmp.ne.s32.totalorder %s212, %s213
      %p225 = scmp.eq.s32.totalorder %s32, 3
      %p226 = por %p224, %p225
      %p228 = scmp.ne.s32.totalorder %s213, %s227
      %p229 = scmp.eq.s32.totalorder %s32, 0
      %p230 = por %p228, %p229
      %s232 = sadd.s32 %s231, 1
      %p235 = scmp.eq.s32.totalorder %s26, 3
      %p236 = scmp.ne.s32.totalorder %s231, %s233
      %p237 = scmp.eq.s32.totalorder %s26, 0
      %p238 = por %p236, %p237
      %p239 = scmp.ne.s32.totalorder %s231, %s233
      %p240 = scmp.eq.s32.totalorder %s31, 3
      %p241 = por %p239, %p240
      %p242 = scmp.ne.s32.totalorder %s233, %s234
      %p243 = scmp.eq.s32.totalorder %s31, 0
      %p244 = por %p242, %p243
      %p245 = scmp.ne.s32.totalorder %s233, %s234
      %p246 = scmp.eq.s32.totalorder %s32, 3
      %p247 = por %p245, %p246
      %p249 = scmp.ne.s32.totalorder %s234, %s248
      %p250 = scmp.eq.s32.totalorder %s32, 0
      %p251 = por %p249, %p250
      %s252 = ssub.s32 %s33, %s45
      %s253 = ssub.s32 %s34, %s41
      %s254 = sor.u32 %s252, %s253
      %p255 = scmp.eq.s32.totalorder %s254, 0
      %s257 = sadd.s32 %s256, 1
      %s258 = scalar_select %p255, %s256, %s257
      %p261 = pneg %p255
      %p262 = scmp.eq.s32.totalorder %s26, 3
      %p263 = por %p261, %p262
      %p264 = scmp.ne.s32.totalorder %s256, %s259
      %p265 = scmp.eq.s32.totalorder %s26, 0
      %p266 = por %p264, %p265
      %p267 = scmp.ne.s32.totalorder %s256, %s259
      %p268 = scmp.eq.s32.totalorder %s31, 3
      %p269 = por %p267, %p268
      %p270 = scmp.ne.s32.totalorder %s259, %s260
      %p271 = scmp.eq.s32.totalorder %s31, 0
      %p272 = por %p270, %p271
      %p273 = scmp.ne.s32.totalorder %s259, %s260
      %p274 = scmp.eq.s32.totalorder %s32, 3
      %p275 = por %p273, %p274
      %p277 = scmp.ne.s32.totalorder %s260, %s276
      %p278 = scmp.eq.s32.totalorder %s32, 0
      %p279 = por %p277, %p278
      %p280 = scmp.le.s32.totalorder 1, %s26
      %p281 = scmp.lt.s32.totalorder %s26, 5
      %p282 = pnand %p280, %p281
      %p283 = pneg %p282
      // Predicated region
      $region9: #{tpu_custom_call.1} parent=5 // pred_check
        _
      $region10: #{tpu_custom_call.1} parent=5 // pred_check_branch
        %285 = sbr.rel (%p282) target = $region12
      $region11: #{tpu_custom_call.1} parent=5 // pred_region
        %s286 = ssub.s32 %s26, 1
        // Predicated region
        $region13: #{tpu_custom_call.1} parent=11 // pred_check
          %p287 = pneg %p139
        $region14: #{tpu_custom_call.1} parent=11 // pred_check_branch
          %289 = sbr.rel (%p287) target = $region16
        $region15: #{tpu_custom_call.1} parent=11 // pred_region
          %291 = vsyncadd [#allocation11], 0
          %s292 = sshll.u32 %s3, 4
          %s293 = int_to_ptr.hbm [resolvable:$true] %s292
          %s294 = sshll.u32 [#allocation10], 4
          %s295 = int_to_ptr.vmem [resolvable:$true] %s294
          %300 = dma.hbm_to_vmem [thread:$0]  %s293, 2048, %s295, [#allocation11], 128, 128, 8
        $region16: #{tpu_custom_call.1} parent=11 // pred_fallthru
          _
        // Predicated region
        $region17: #{tpu_custom_call.1} parent=11 // pred_check
          %p301 = pneg %p160
        $region18: #{tpu_custom_call.1} parent=11 // pred_check_branch
          %303 = sbr.rel (%p301) target = $region20
        $region19: #{tpu_custom_call.1} parent=11 // pred_region
          _
        $region20: #{tpu_custom_call.1} parent=11 // pred_fallthru
          _
        // Predicated region
        $region21: #{tpu_custom_call.1} parent=11 // pred_check
          %p304 = pneg %p181
        $region22: #{tpu_custom_call.1} parent=11 // pred_check_branch
          %306 = sbr.rel (%p304) target = $region24
        $region23: #{tpu_custom_call.1} parent=11 // pred_region
          %308 = vsyncadd [#allocation11], 0
          %s309 = sshll.u32 %s5, 4
          %s310 = int_to_ptr.hbm [resolvable:$true] %s309
          %s311 = sshll.u32 [#allocation12], 4
          %s312 = int_to_ptr.vmem [resolvable:$true] %s311
          %317 = dma.hbm_to_vmem [thread:$0]  %s310, 2048, %s312, [#allocation11], 128, 128, 8
        $region24: #{tpu_custom_call.1} parent=11 // pred_fallthru
          _
        // Predicated region
        $region25: #{tpu_custom_call.1} parent=11 // pred_check
          %p318 = pneg %p202
        $region26: #{tpu_custom_call.1} parent=11 // pred_check_branch
          %320 = sbr.rel (%p318) target = $region28
        $region27: #{tpu_custom_call.1} parent=11 // pred_region
          _
        $region28: #{tpu_custom_call.1} parent=11 // pred_fallthru
          _
        // Predicated region
        $region29: #{tpu_custom_call.1} parent=11 // pred_check
          %p321 = pneg %p223
        $region30: #{tpu_custom_call.1} parent=11 // pred_check_branch
          %323 = sbr.rel (%p321) target = $region32
        $region31: #{tpu_custom_call.1} parent=11 // pred_region
          %325 = vsyncadd [#allocation14], 0
          %s326 = sshll.u32 %s7, 4
          %s327 = int_to_ptr.hbm [resolvable:$true] %s326
          %s328 = sshll.u32 [#allocation13], 4
          %s329 = int_to_ptr.vmem [resolvable:$true] %s328
          %334 = dma.hbm_to_vmem [thread:$0]  %s327, 2048, %s329, [#allocation14], 128, 128, 8
        $region32: #{tpu_custom_call.1} parent=11 // pred_fallthru
          _
        // Predicated region
        $region33: #{tpu_custom_call.1} parent=11 // pred_check
          %p335 = pneg %p244
        $region34: #{tpu_custom_call.1} parent=11 // pred_check_branch
          %337 = sbr.rel (%p335) target = $region36
        $region35: #{tpu_custom_call.1} parent=11 // pred_region
          _
        $region36: #{tpu_custom_call.1} parent=11 // pred_fallthru
          _
      $region12: #{tpu_custom_call.1} parent=5 // pred_fallthru
        _
      %p338 = scmp.lt.s32.totalorder %s26, 4
      // Predicated region
      $region37: #{tpu_custom_call.1} parent=5 // pred_check
        %p339 = pneg %p338
      $region38: #{tpu_custom_call.1} parent=5 // pred_check_branch
        %341 = sbr.rel (%p339) target = $region40
      $region39: #{tpu_custom_call.1} parent=5 // pred_region
        // Predicated region
        $region41: #{tpu_custom_call.1} parent=39 // pred_check
          %p342 = pneg %p60
        $region42: #{tpu_custom_call.1} parent=39 // pred_check_branch
          %344 = sbr.rel (%p342) target = $region44
        $region43: #{tpu_custom_call.1} parent=39 // pred_region
          %s345 = sand.u32 %s50, 1
          %s346 = scalar_lea.sflag [#allocation5], %s345
          %s347 = sand.u32 %s50, 1
          %s348 = smul.addr %s347, 16
          %s349 = scalar_lea.vmem [#allocation4], %s348
          %s350 = smul.u32 2, %s33
          %352 = vsyncadd %s346, 0
          %s353 = smul.addr %s350, 2
          %s354 = sadd.s32 %s34, %s353
          %s355 = smul.addr %s354, 8
          %s356 = scalar_lea.hbm %s0, %s355
          %s357 = sshll.u32 %s356, 4
          %s358 = int_to_ptr.hbm [resolvable:$true] %s357
          %s359 = sshll.u32 %s349, 4
          %s360 = int_to_ptr.vmem [resolvable:$true] %s359
          %365 = dma.hbm_to_vmem [thread:$0]  %s358, 256, %s360, %s346, 256, 128, 8
        $region44: #{tpu_custom_call.1} parent=39 // pred_fallthru
          _
        // Predicated region
        $region45: #{tpu_custom_call.1} parent=39 // pred_check
          %p366 = pneg %p86
        $region46: #{tpu_custom_call.1} parent=39 // pred_check_branch
          %368 = sbr.rel (%p366) target = $region48
        $region47: #{tpu_custom_call.1} parent=39 // pred_region
          %s369 = sand.u32 %s26, 1
          %s370 = scalar_lea.sflag [#allocation8], %s369
          %s371 = sand.u32 %s76, 1
          %s372 = smul.addr %s371, 32
          %s373 = scalar_lea.vmem [#allocation7], %s372
          %s374 = smul.u32 2, %s33
          %376 = vsyncadd %s370, 0
          %s377 = smul.addr %s374, 2
          %s378 = smul.addr %s377, 8
          %s379 = scalar_lea.hbm %s1, %s378
          %s380 = sshll.u32 %s379, 4
          %s381 = int_to_ptr.hbm [resolvable:$true] %s380
          %s382 = sshll.u32 %s373, 4
          %s383 = int_to_ptr.vmem [resolvable:$true] %s382
          %388 = dma.hbm_to_vmem [thread:$0]  %s381, 512, %s383, %s370, 128, 128, 8
        $region48: #{tpu_custom_call.1} parent=39 // pred_fallthru
          _
        // Predicated region
        $region49: #{tpu_custom_call.1} parent=39 // pred_check
          %p389 = pneg %p112
        $region50: #{tpu_custom_call.1} parent=39 // pred_check_branch
          %391 = sbr.rel (%p389) target = $region52
        $region51: #{tpu_custom_call.1} parent=39 // pred_region
          %s392 = sand.u32 %s26, 1
          %s393 = scalar_lea.sflag [#allocation8], %s392
          %s394 = sand.u32 %s102, 1
          %s395 = smul.addr %s394, 32
          %s396 = scalar_lea.vmem [#allocation9], %s395
          %s397 = smul.u32 2, %s33
          %399 = vsyncadd %s393, 0
          %s400 = smul.addr %s397, 2
          %s401 = smul.addr %s400, 8
          %s402 = scalar_lea.hbm %s2, %s401
          %s403 = sshll.u32 %s402, 4
          %s404 = int_to_ptr.hbm [resolvable:$true] %s403
          %s405 = sshll.u32 %s396, 4
          %s406 = int_to_ptr.vmem [resolvable:$true] %s405
          %411 = dma.hbm_to_vmem [thread:$0]  %s404, 512, %s406, %s393, 128, 128, 8
        $region52: #{tpu_custom_call.1} parent=39 // pred_fallthru
          _
      $region40: #{tpu_custom_call.1} parent=5 // pred_fallthru
        _
      %p412 = scmp.le.s32.totalorder 1, %s26
      %p413 = scmp.lt.s32.totalorder %s26, 5
      %p414 = pnand %p412, %p413
      %p415 = pneg %p414
      // Predicated region
      $region53: #{tpu_custom_call.1} parent=5 // pred_check
        _
      $region54: #{tpu_custom_call.1} parent=5 // pred_check_branch
        %417 = sbr.rel (%p414) target = $region56
      $region55: #{tpu_custom_call.1} parent=5 // pred_region
        %s418 = ssub.s32 %s26, 1
        %s419 = sand.u32 %s53, 1
        %s420 = scalar_lea.sflag [#allocation5], %s419
        %s421 = sand.u32 %s53, 1
        %s422 = smul.addr %s421, 16
        %s423 = scalar_lea.vmem [#allocation4], %s422
        // Predicated region
        $region57: #{tpu_custom_call.1} parent=55 // pred_check
          %p424 = pneg %p66
        $region58: #{tpu_custom_call.1} parent=55 // pred_check_branch
          %426 = sbr.rel (%p424) target = $region60
        $region59: #{tpu_custom_call.1} parent=55 // pred_region
          %428 = dma.done %s420, 256
        $region60: #{tpu_custom_call.1} parent=55 // pred_fallthru
          _
        %s429 = sand.u32 %s31, 1
        %s430 = scalar_lea.sflag [#allocation8], %s429
        %s431 = sand.u32 %s79, 1
        %s432 = smul.addr %s431, 32
        %s433 = scalar_lea.vmem [#allocation7], %s432
        // Predicated region
        $region61: #{tpu_custom_call.1} parent=55 // pred_check
          %p434 = pneg %p92
        $region62: #{tpu_custom_call.1} parent=55 // pred_check_branch
          %436 = sbr.rel (%p434) target = $region64
        $region63: #{tpu_custom_call.1} parent=55 // pred_region
          %438 = dma.done %s430, 512
        $region64: #{tpu_custom_call.1} parent=55 // pred_fallthru
          _
        %s439 = sand.u32 %s31, 1
        %s440 = scalar_lea.sflag [#allocation8], %s439
        %s441 = sand.u32 %s105, 1
        %s442 = smul.addr %s441, 32
        %s443 = scalar_lea.vmem [#allocation9], %s442
        // Predicated region
        $region65: #{tpu_custom_call.1} parent=55 // pred_check
          %p444 = pneg %p118
        $region66: #{tpu_custom_call.1} parent=55 // pred_check_branch
          %446 = sbr.rel (%p444) target = $region68
        $region67: #{tpu_custom_call.1} parent=55 // pred_region
          %448 = dma.done %s440, 512
        $region68: #{tpu_custom_call.1} parent=55 // pred_fallthru
          _
        // Predicated region
        $region69: #{tpu_custom_call.1} parent=55 // pred_check
          %p449 = pneg %p139
        $region70: #{tpu_custom_call.1} parent=55 // pred_check_branch
          %451 = sbr.rel (%p449) target = $region72
        $region71: #{tpu_custom_call.1} parent=55 // pred_region
          %453 = dma.done [#allocation11], 2048
        $region72: #{tpu_custom_call.1} parent=55 // pred_fallthru
          _
        // Predicated region
        $region73: #{tpu_custom_call.1} parent=55 // pred_check
          %p454 = pneg %p181
        $region74: #{tpu_custom_call.1} parent=55 // pred_check_branch
          %456 = sbr.rel (%p454) target = $region76
        $region75: #{tpu_custom_call.1} parent=55 // pred_region
          %458 = dma.done [#allocation11], 2048
        $region76: #{tpu_custom_call.1} parent=55 // pred_fallthru
          _
        // Predicated region
        $region77: #{tpu_custom_call.1} parent=55 // pred_check
          %p459 = pneg %p223
        $region78: #{tpu_custom_call.1} parent=55 // pred_check_branch
          %461 = sbr.rel (%p459) target = $region80
        $region79: #{tpu_custom_call.1} parent=55 // pred_region
          %463 = dma.done [#allocation14], 2048
        $region80: #{tpu_custom_call.1} parent=55 // pred_fallthru
          _
        %s464 = sand.u32 %s53, 1
        %s465 = scalar_lea.sflag [#allocation5], %s464
        %s466 = sand.u32 %s53, 1
        %s467 = smul.addr %s466, 16
        %s468 = scalar_lea.vmem [#allocation4], %s467
        %p469 = pneg %p66
        %p470 = pneg %p63
        %s471 = sand.u32 %s31, 1
        %s472 = scalar_lea.sflag [#allocation8], %s471
        %s473 = sand.u32 %s79, 1
        %s474 = smul.addr %s473, 32
        %s475 = scalar_lea.vmem [#allocation7], %s474
        %p476 = pneg %p92
        %p477 = pneg %p89
        %s478 = sand.u32 %s31, 1
        %s479 = scalar_lea.sflag [#allocation8], %s478
        %s480 = sand.u32 %s105, 1
        %s481 = smul.addr %s480, 32
        %s482 = scalar_lea.vmem [#allocation9], %s481
        %p483 = pneg %p118
        %p484 = pneg %p115
        %p485 = pneg %p139
        %p486 = pneg %p136
        %p487 = pneg %p160
        %p488 = pneg %p157
        %p489 = pneg %p181
        %p490 = pneg %p178
        %p491 = pneg %p202
        %p492 = pneg %p199
        %p493 = pneg %p223
        %p494 = pneg %p220
        %p495 = pneg %p244
        %p496 = pneg %p241
        %p497 = pneg %p272
        %p498 = pneg %p269
        %s499 = sand.u32 %s259, 1
        %s500 = scalar_lea.sflag [#allocation6], %s499
        %s501 = sand.u32 %s259, 1
        %s502 = smul.addr %s501, 16
        %s503 = scalar_lea.vmem [#allocation15], %s502
        %s504 = smul.u32 2, %s35
        %s505 = smul.u32 2, %s35
        %s506 = smul.u32 2, %s35
        %s507 = smul.u32 2, %s35
        %p508 = scmp.eq.s32.totalorder %s36, 0
        // Predicated region
        $region81: #{tpu_custom_call.1} parent=55 // pred_check
          %p509 = pneg %p508
        $region82: #{tpu_custom_call.1} parent=55 // pred_check_branch
          %511 = sbr.rel (%p509) target = $region84
        $region83: #{tpu_custom_call.1} parent=55 // pred_region
          %v512 = vld [vmem:[%s433] sm:$0xff]
          %v513 = vld [vmem:[%s433 + $0x8] sm:$0xff]
          %v514 = vld [vmem:[%s433 + $0x10] sm:$0xff]
          %v515 = vld [vmem:[%s433 + $0x18] sm:$0xff]
          %v516 = vld [vmem:[%s443] sm:$0xff]
          %v517 = vld [vmem:[%s443 + $0x8] sm:$0xff]
          %v518 = vld [vmem:[%s443 + $0x10] sm:$0xff]
          %v519 = vld [vmem:[%s443 + $0x18] sm:$0xff]
          %v520 = vld [vmem:[#allocation10] sm:$0xff]
          %v521 = vld [vmem:[#allocation10 + $0x8] sm:$0xff]
          %v522 = vld [vmem:[#allocation10 + $0x10] sm:$0xff]
          %v523 = vld [vmem:[#allocation10 + $0x18] sm:$0xff]
          %v524 = vld [vmem:[#allocation10 + $0x20] sm:$0xff]
          %v525 = vld [vmem:[#allocation10 + $0x28] sm:$0xff]
          %v526 = vld [vmem:[#allocation10 + $0x30] sm:$0xff]
          %v527 = vld [vmem:[#allocation10 + $0x38] sm:$0xff]
          %v528 = vld [vmem:[#allocation10 + $0x40] sm:$0xff]
          %v529 = vld [vmem:[#allocation10 + $0x48] sm:$0xff]
          %v530 = vld [vmem:[#allocation10 + $0x50] sm:$0xff]
          %v531 = vld [vmem:[#allocation10 + $0x58] sm:$0xff]
          %v532 = vld [vmem:[#allocation10 + $0x60] sm:$0xff]
          %v533 = vld [vmem:[#allocation10 + $0x68] sm:$0xff]
          %v534 = vld [vmem:[#allocation10 + $0x70] sm:$0xff]
          %v535 = vld [vmem:[#allocation10 + $0x78] sm:$0xff]
          %v536 = vld [vmem:[%s4] sm:$0x1]
          %v538 = vperm.slane %v536, 0
          %540 = vmatpush.msra.mxu0 %v535
          %541 = vmatpush.msra.mxu0 %v534
          %542 = vmatpush.msra.mxu0 %v533
          %543 = vmatpush.msra.mxu0 %v532
          %544 = vmatpush.msra.mxu0 %v531
          %545 = vmatpush.msra.mxu0 %v530
          %546 = vmatpush.msra.mxu0 %v529
          %547 = vmatpush.msra.mxu0 %v528
          %548 = vmatpush.msra.mxu0 %v527
          %549 = vmatpush.msra.mxu0 %v526
          %550 = vmatpush.msra.mxu0 %v525
          %551 = vmatpush.msra.mxu0 %v524
          %552 = vmatpush.msra.mxu0 %v523
          %553 = vmatpush.msra.mxu0 %v522
          %554 = vmatpush.msra.mxu0 %v521
          %555 = vmatpush.msra.mxu0 %v520
          %556 = vmatmul.f32.gmra.mxu0 %v512
          %v557 = vpop.f32.mrf.mxu0
          %v558 = vadd.f32 %v538, %v557
          %559 = vmatmul.f32.gmra.mxu0 %v513
          %v560 = vpop.f32.mrf.mxu0
          %v561 = vadd.f32 %v538, %v560
          %562 = vmatmul.f32.gmra.mxu0 %v514
          %v563 = vpop.f32.mrf.mxu0
          %v564 = vadd.f32 %v538, %v563
          %565 = vmatmul.f32.gmra.mxu0 %v515
          %v566 = vpop.f32.mrf.mxu0
          %v567 = vadd.f32 %v538, %v566
          %568 = vdwg.mxu0
          %v569 = vld [vmem:[#allocation12] sm:$0xff]
          %v570 = vld [vmem:[#allocation12 + $0x8] sm:$0xff]
          %v571 = vld [vmem:[#allocation12 + $0x10] sm:$0xff]
          %v572 = vld [vmem:[#allocation12 + $0x18] sm:$0xff]
          %v573 = vld [vmem:[#allocation12 + $0x20] sm:$0xff]
          %v574 = vld [vmem:[#allocation12 + $0x28] sm:$0xff]
          %v575 = vld [vmem:[#allocation12 + $0x30] sm:$0xff]
          %v576 = vld [vmem:[#allocation12 + $0x38] sm:$0xff]
          %v577 = vld [vmem:[#allocation12 + $0x40] sm:$0xff]
          %v578 = vld [vmem:[#allocation12 + $0x48] sm:$0xff]
          %v579 = vld [vmem:[#allocation12 + $0x50] sm:$0xff]
          %v580 = vld [vmem:[#allocation12 + $0x58] sm:$0xff]
          %v581 = vld [vmem:[#allocation12 + $0x60] sm:$0xff]
          %v582 = vld [vmem:[#allocation12 + $0x68] sm:$0xff]
          %v583 = vld [vmem:[#allocation12 + $0x70] sm:$0xff]
          %v584 = vld [vmem:[#allocation12 + $0x78] sm:$0xff]
          %v585 = vld [vmem:[%s6] sm:$0x1]
          %v587 = vperm.slane %v585, 0
          %589 = vmatpush.msra.mxu0 %v584
          %590 = vmatpush.msra.mxu0 %v583
          %591 = vmatpush.msra.mxu0 %v582
          %592 = vmatpush.msra.mxu0 %v581
          %593 = vmatpush.msra.mxu0 %v580
          %594 = vmatpush.msra.mxu0 %v579
          %595 = vmatpush.msra.mxu0 %v578
          %596 = vmatpush.msra.mxu0 %v577
          %597 = vmatpush.msra.mxu0 %v576
          %598 = vmatpush.msra.mxu0 %v575
          %599 = vmatpush.msra.mxu0 %v574
          %600 = vmatpush.msra.mxu0 %v573
          %601 = vmatpush.msra.mxu0 %v572
          %602 = vmatpush.msra.mxu0 %v571
          %603 = vmatpush.msra.mxu0 %v570
          %604 = vmatpush.msra.mxu0 %v569
          %605 = vmatmul.f32.gmra.mxu0 %v516
          %v606 = vpop.f32.mrf.mxu0
          %v607 = vadd.f32 %v587, %v606
          %608 = vmatmul.f32.gmra.mxu0 %v517
          %v609 = vpop.f32.mrf.mxu0
          %v610 = vadd.f32 %v587, %v609
          %611 = vmatmul.f32.gmra.mxu0 %v518
          %v612 = vpop.f32.mrf.mxu0
          %v613 = vadd.f32 %v587, %v612
          %614 = vmatmul.f32.gmra.mxu0 %v519
          %v615 = vpop.f32.mrf.mxu0
          %v616 = vadd.f32 %v587, %v615
          %617 = vdwg.mxu0
          %618 = vst [vmem:[#allocation2] sm:$0xff] %v558
          %619 = vst [vmem:[#allocation2 + $0x8] sm:$0xff] %v561
          %620 = vst [vmem:[#allocation2 + $0x10] sm:$0xff] %v564
          %621 = vst [vmem:[#allocation2 + $0x18] sm:$0xff] %v567
          %622 = vst [vmem:[#allocation3] sm:$0xff] %v607
          %623 = vst [vmem:[#allocation3 + $0x8] sm:$0xff] %v610
          %624 = vst [vmem:[#allocation3 + $0x10] sm:$0xff] %v613
          %625 = vst [vmem:[#allocation3 + $0x18] sm:$0xff] %v616
        $region84: #{tpu_custom_call.1} parent=55 // pred_fallthru
          _
        %v626 = vld [vmem:[#allocation2] sm:$0xff]
        %v627 = vld [vmem:[#allocation2 + $0x8] sm:$0xff]
        %v628 = vld [vmem:[#allocation2 + $0x10] sm:$0xff]
        %v629 = vld [vmem:[#allocation2 + $0x18] sm:$0xff]
        %v630 = vld [vmem:[#allocation3] sm:$0xff]
        %v631 = vld [vmem:[#allocation3 + $0x8] sm:$0xff]
        %v632 = vld [vmem:[#allocation3 + $0x10] sm:$0xff]
        %v633 = vld [vmem:[#allocation3 + $0x18] sm:$0xff]
        %v634 = vld [vmem:[%s423] sm:$0xff]
        %v635 = vld [vmem:[%s423 + $0x8] sm:$0xff]
        %636 = vmatpush.xpose.msra.mxu0 0.0
        %637 = vmatpush.xpose.msra.mxu0 0.0
        %638 = vmatpush.xpose.msra.mxu0 0.0
        %639 = vmatpush.xpose.msra.mxu0 0.0
        %640 = vmatpush.xpose.msra.mxu0 0.0
        %641 = vmatpush.xpose.msra.mxu0 0.0
        %642 = vmatpush.xpose.msra.mxu0 0.0
        %643 = vmatpush.xpose.msra.mxu0 0.0
        %644 = vmatpush.xpose.msra.mxu0 0.0
        %645 = vmatpush.xpose.msra.mxu0 0.0
        %646 = vmatpush.xpose.msra.mxu0 0.0
        %647 = vmatpush.xpose.msra.mxu0 0.0
        %648 = vmatpush.xpose.msra.mxu0 0.0
        %649 = vmatpush.xpose.msra.mxu0 0.0
        %650 = vmatpush.xpose.msra.mxu0 %v627
        %651 = vmatpush.xpose.msra.mxu0 %v626
        %652 = vmatmul.f32.gmra.mxu0 %v634
        %v653 = vpop.f32.mrf.mxu0
        %v654 = vadd.f32 0.0, %v653
        %655 = vdwg.mxu0
        %656 = vmatpush.xpose.msra.mxu0 0.0
        %657 = vmatpush.xpose.msra.mxu0 0.0
        %658 = vmatpush.xpose.msra.mxu0 0.0
        %659 = vmatpush.xpose.msra.mxu0 0.0
        %660 = vmatpush.xpose.msra.mxu0 0.0
        %661 = vmatpush.xpose.msra.mxu0 0.0
        %662 = vmatpush.xpose.msra.mxu0 0.0
        %663 = vmatpush.xpose.msra.mxu0 0.0
        %664 = vmatpush.xpose.msra.mxu0 0.0
        %665 = vmatpush.xpose.msra.mxu0 0.0
        %666 = vmatpush.xpose.msra.mxu0 0.0
        %667 = vmatpush.xpose.msra.mxu0 0.0
        %668 = vmatpush.xpose.msra.mxu0 0.0
        %669 = vmatpush.xpose.msra.mxu0 0.0
        %670 = vmatpush.xpose.msra.mxu0 %v629
        %671 = vmatpush.xpose.msra.mxu0 %v628
        %672 = vmatmul.f32.gmra.mxu0 %v635
        %v673 = vpop.f32.mrf.mxu0
        %v674 = vadd.f32 0.0, %v673
        %675 = vdwg.mxu0
        %vm676 = vcmask 130048
        %v677 = vsel %vm676, %v654, -inf
        %678 = vmax.xlane.f32.xlu0 %v677
        %v679 = vpop.xlane.xlu0 %678
        %v680 = vsel %vm676, %v674, -inf
        %681 = vmax.xlane.f32.xlu0 %v680
        %v682 = vpop.xlane.xlu0 %681
        %v683 = vsub.f32 %v654, %v679
        %v684 = vsub.f32 %v674, %v682
        %v685 = vpow.pop %v683
        %v686 = vpow.pop %v684
        %v687 = vsel %vm676, %v685, 0.0
        %688 = vadd.xlane.f32.xlu0 %v687
        %v689 = vpop.xlane.xlu0 %688
        %v690 = vsel %vm676, %v686, 0.0
        %691 = vadd.xlane.f32.xlu0 %v690
        %v692 = vpop.xlane.xlu0 %691
        %v694 = vsel %vm676, %v685, 0
        %696 = vmatpush.msra.mxu0 0.0
        %697 = vmatpush.msra.mxu0 0.0
        %698 = vmatpush.msra.mxu0 0.0
        %699 = vmatpush.msra.mxu0 0.0
        %700 = vmatpush.msra.mxu0 0.0
        %701 = vmatpush.msra.mxu0 0.0
        %702 = vmatpush.msra.mxu0 0.0
        %703 = vmatpush.msra.mxu0 0.0
        %704 = vmatpush.msra.mxu0 0.0
        %705 = vmatpush.msra.mxu0 0.0
        %706 = vmatpush.msra.mxu0 0.0
        %707 = vmatpush.msra.mxu0 0.0
        %708 = vmatpush.msra.mxu0 0.0
        %709 = vmatpush.msra.mxu0 0.0
        %710 = vmatpush.msra.mxu0 %v631
        %711 = vmatpush.msra.mxu0 %v630
        %712 = vmatmul.f32.gmra.mxu0 %v694
        %v713 = vpop.f32.mrf.mxu0
        %v714 = vadd.f32 0.0, %v713
        %715 = vdwg.mxu0
        %v717 = vsel %vm676, %v686, 0
        %719 = vmatpush.msra.mxu0 0.0
        %720 = vmatpush.msra.mxu0 0.0
        %721 = vmatpush.msra.mxu0 0.0
        %722 = vmatpush.msra.mxu0 0.0
        %723 = vmatpush.msra.mxu0 0.0
        %724 = vmatpush.msra.mxu0 0.0
        %725 = vmatpush.msra.mxu0 0.0
        %726 = vmatpush.msra.mxu0 0.0
        %727 = vmatpush.msra.mxu0 0.0
        %728 = vmatpush.msra.mxu0 0.0
        %729 = vmatpush.msra.mxu0 0.0
        %730 = vmatpush.msra.mxu0 0.0
        %731 = vmatpush.msra.mxu0 0.0
        %732 = vmatpush.msra.mxu0 0.0
        %733 = vmatpush.msra.mxu0 %v633
        %734 = vmatpush.msra.mxu0 %v632
        %735 = vmatmul.f32.gmra.mxu0 %v717
        %v736 = vpop.f32.mrf.mxu0
        %v737 = vadd.f32 0.0, %v736
        %738 = vdwg.mxu0
        %v739 = vrcp.pop %v689
        %v740 = vmul.f32 %v689, %v739
        %v741 = vsub.f32 1.0, %v740
        %v742 = vmul.f32 %v739, %v741
        %v743 = vadd.f32 %v739, %v742
        %vm744 = vweird.f32 %v689
        %vm745 = vweird.f32 %v739
        %vm746 = vmor %vm744, %vm745
        %v747 = vsel %vm746, %v739, %v743
        %v748 = vand.u32 2147483647, %v689
        %vm749 = vcmp.eq.f32.partialorder %v748, 8.507059e+37
        %v750 = vand.u32 %v689, 2147483648
        %v751 = vor.u32 1.1754944e-38, %v750
        %v752 = vsel %vm749, %v751, %v747
        %v753 = vrcp.pop %v692
        %v754 = vmul.f32 %v692, %v753
        %v755 = vsub.f32 1.0, %v754
        %v756 = vmul.f32 %v753, %v755
        %v757 = vadd.f32 %v753, %v756
        %vm758 = vweird.f32 %v692
        %vm759 = vweird.f32 %v753
        %vm760 = vmor %vm758, %vm759
        %v761 = vsel %vm760, %v753, %v757
        %v762 = vand.u32 2147483647, %v692
        %vm763 = vcmp.eq.f32.partialorder %v762, 8.507059e+37
        %v764 = vand.u32 %v692, 2147483648
        %v765 = vor.u32 1.1754944e-38, %v764
        %v766 = vsel %vm763, %v765, %v761
        %v767 = vmul.f32 %v714, %v752
        %v768 = vmul.f32 %v737, %v766
        %v769 = vld [vmem:[#allocation13] sm:$0xff]
        %v770 = vld [vmem:[#allocation13 + $0x8] sm:$0xff]
        %v771 = vld [vmem:[#allocation13 + $0x10] sm:$0xff]
        %v772 = vld [vmem:[#allocation13 + $0x18] sm:$0xff]
        %v773 = vld [vmem:[#allocation13 + $0x20] sm:$0xff]
        %v774 = vld [vmem:[#allocation13 + $0x28] sm:$0xff]
        %v775 = vld [vmem:[#allocation13 + $0x30] sm:$0xff]
        %v776 = vld [vmem:[#allocation13 + $0x38] sm:$0xff]
        %v777 = vld [vmem:[#allocation13 + $0x40] sm:$0xff]
        %v778 = vld [vmem:[#allocation13 + $0x48] sm:$0xff]
        %v779 = vld [vmem:[#allocation13 + $0x50] sm:$0xff]
        %v780 = vld [vmem:[#allocation13 + $0x58] sm:$0xff]
        %v781 = vld [vmem:[#allocation13 + $0x60] sm:$0xff]
        %v782 = vld [vmem:[#allocation13 + $0x68] sm:$0xff]
        %v783 = vld [vmem:[#allocation13 + $0x70] sm:$0xff]
        %v784 = vld [vmem:[#allocation13 + $0x78] sm:$0xff]
        %v785 = vld [vmem:[%s8] sm:$0x1]
        %v787 = vperm.slane %v785, 0
        %789 = vmatpush.msra.mxu0 %v784
        %790 = vmatpush.msra.mxu0 %v783
        %791 = vmatpush.msra.mxu0 %v782
        %792 = vmatpush.msra.mxu0 %v781
        %793 = vmatpush.msra.mxu0 %v780
        %794 = vmatpush.msra.mxu0 %v779
        %795 = vmatpush.msra.mxu0 %v778
        %796 = vmatpush.msra.mxu0 %v777
        %797 = vmatpush.msra.mxu0 %v776
        %798 = vmatpush.msra.mxu0 %v775
        %799 = vmatpush.msra.mxu0 %v774
        %800 = vmatpush.msra.mxu0 %v773
        %801 = vmatpush.msra.mxu0 %v772
        %802 = vmatpush.msra.mxu0 %v771
        %803 = vmatpush.msra.mxu0 %v770
        %804 = vmatpush.msra.mxu0 %v769
        %805 = vmatmul.f32.gmra.mxu0 %v767
        %v806 = vpop.f32.mrf.mxu0
        %v807 = vadd.f32 %v787, %v806
        %808 = vmatmul.f32.gmra.mxu0 %v768
        %v809 = vpop.f32.mrf.mxu0
        %v810 = vadd.f32 %v787, %v809
        %811 = vdwg.mxu0
        %812 = vst [vmem:[%s503] sm:$0xff] %v807
        %813 = vst [vmem:[%s503 + $0x8] sm:$0xff] %v810
        %s814 = sand.u32 %s259, 1
        %s815 = scalar_lea.sflag [#allocation6], %s814
        %s816 = sand.u32 %s259, 1
        %s817 = smul.addr %s816, 16
        %s818 = scalar_lea.vmem [#allocation15], %s817
        // Predicated region
        $region85: #{tpu_custom_call.1} parent=55 // pred_check
          %p819 = pneg %p269
        $region86: #{tpu_custom_call.1} parent=55 // pred_check_branch
          %821 = sbr.rel (%p819) target = $region88
        $region87: #{tpu_custom_call.1} parent=55 // pred_region
          %s822 = smul.u32 2, %s35
          %824 = vsyncadd %s815, 0
          %s825 = smul.addr %s822, 2
          %s826 = sadd.s32 %s36, %s825
          %s827 = smul.addr %s826, 8
          %s828 = scalar_lea.hbm %s9, %s827
          %s829 = sshll.u32 %s818, 4
          %s830 = int_to_ptr.vmem [resolvable:$true] %s829
          %s831 = sshll.u32 %s828, 4
          %s832 = int_to_ptr.hbm [resolvable:$true] %s831
          %837 = dma.vmem_to_hbm [thread:$0]  %s830, 256, %s832, %s815, 128, 256, 8
        $region88: #{tpu_custom_call.1} parent=55 // pred_fallthru
          _
      $region56: #{tpu_custom_call.1} parent=5 // pred_fallthru
        _
      %p838 = scmp.le.s32.totalorder 2, %s26
      // Predicated region
      $region89: #{tpu_custom_call.1} parent=5 // pred_check
        %p839 = pneg %p838
      $region90: #{tpu_custom_call.1} parent=5 // pred_check_branch
        %841 = sbr.rel (%p839) target = $region92
      $region91: #{tpu_custom_call.1} parent=5 // pred_region
        %s842 = ssub.s32 %s26, 2
        // Predicated region
        $region93: #{tpu_custom_call.1} parent=91 // pred_check
          %p843 = pneg %p275
        $region94: #{tpu_custom_call.1} parent=91 // pred_check_branch
          %845 = sbr.rel (%p843) target = $region96
        $region95: #{tpu_custom_call.1} parent=91 // pred_region
          %s846 = sand.u32 %s260, 1
          %s847 = scalar_lea.sflag [#allocation6], %s846
          %s848 = sand.u32 %s260, 1
          %s849 = smul.addr %s848, 16
          %s850 = scalar_lea.vmem [#allocation15], %s849
          %852 = dma.done %s847, 256
        $region96: #{tpu_custom_call.1} parent=91 // pred_fallthru
          _
      $region92: #{tpu_custom_call.1} parent=5 // pred_fallthru
        _
    $region6: #{tpu_custom_call.1} parent=1 // loop_footer
      %s30 = sadd.s32 1, %s26
    $region7: #{tpu_custom_call.1} parent=1 // loop_footer_branch
      %25 = sbr.rel target = $region3
    $region8: #{tpu_custom_call.1} parent=1 // loop_exit
      _
    %853 = vsyncpa [#allocation5], 1
    %s854 = scalar_lea.sflag [#allocation5], 1
    %855 = vsyncpa %s854, 1
    %856 = vsyncpa [#allocation8], 1
    %s857 = scalar_lea.sflag [#allocation8], 1
    %858 = vsyncpa %s857, 1
    %859 = vsyncpa [#allocation11], 1
    %860 = vsyncpa [#allocation14], 1
    %861 = vsyncpa [#allocation6], 1
    %s862 = scalar_lea.sflag [#allocation6], 1
    %863 = vsyncpa %s862, 1

</llo_original>
